<compile_context>
chip_gen: v5e
topology: v5e:2x2
jax: 0.10.0
libtpu: 0.0.40
codegen_flags: <defaults>
</compile_context>

<pallas_src>
import functools
import numpy as np
import jax
import jax.numpy as jnp
from jax.experimental import pallas as pl
from jax.experimental.pallas import tpu as pltpu

BN_EPS = 1e-5
RIG_DIM = 174
LAST_DIM = 2048
LAYER_CFG = [(64, 3, 1), (128, 4, 2), (256, 6, 2), (512, 3, 2)]  # resnet50
ACT_DTYPE = jnp.bfloat16
LANE = 128


def _round_up(x, m):
    return ((x + m - 1) // m) * m


def _vmem_limit(*byte_counts):
    """Double-buffered block footprint + headroom, clamped to a safe range on
    v5e/v6e (128 MiB) and v7x (64 MiB per TC)."""
    need = 2 * sum(int(b) for b in byte_counts) + (4 << 20)
    return int(min(max(need, 16 << 20), 48 << 20))


def _pick_tile(dim, candidates):
    for c in candidates:
        if dim % c == 0:
            return c
    return None


# --------------------------- Pallas kernels ---------------------------------

def _mm_single_kernel(a_ref, b_ref, shift_ref, *refs, relu, has_res):
    """Single-K-step GEMM: y = a@b + shift (+res)(+relu) written straight to o_ref
    (no f32 scratch round trip)."""
    if has_res:
        res_ref, o_ref = refs
    else:
        (o_ref,) = refs
        res_ref = None
    y = jnp.dot(a_ref[...], b_ref[...], preferred_element_type=jnp.float32)
    y = y + shift_ref[...]
    if has_res:
        y = y + res_ref[...].astype(jnp.float32)
    if relu:
        y = jnp.maximum(y, 0.0)
    o_ref[...] = y.astype(o_ref.dtype)


def _mm_multi_kernel(a_ref, b_ref, shift_ref, *refs, relu, has_res):
    """Multi-K-step GEMM with f32 VMEM accumulator; k==0 overwrites (no zero pass)."""
    if has_res:
        res_ref, o_ref, acc_ref = refs
    else:
        o_ref, acc_ref = refs
        res_ref = None
    k = pl.program_id(2)
    prod = jnp.dot(a_ref[...], b_ref[...], preferred_element_type=jnp.float32)

    @pl.when(k == 0)
    def _():
        acc_ref[...] = prod

    @pl.when(k > 0)
    def _():
        acc_ref[...] += prod

    @pl.when(k == pl.num_programs(2) - 1)
    def _():
        y = acc_ref[...] + shift_ref[...]
        if has_res:
            y = y + res_ref[...].astype(jnp.float32)
        if relu:
            y = jnp.maximum(y, 0.0)
        o_ref[...] = y.astype(o_ref.dtype)


def _conv_s1_kernel(x_ref, w_ref, shift_ref, o_ref, *, kh, kw, ow8, relu):
    """Implicit-GEMM 3x3 / stride-1 conv.  The padded NHWC image lives in VMEM;
    the kh*kw taps are sliced in-kernel.  The slice width ow8 is a multiple of 8,
    so the (toh, ow8, cin)->(toh*ow8, cin) reshapes are pure relabelings (no
    relayout copies); the f32 accumulator is register-resident and bounded by
    the wrapper's toh choice.  Fused BN shift + ReLU epilogue."""
    toh, ow, tn = o_ref.shape
    cin = x_ref.shape[-1]
    row0 = pl.program_id(2) * toh
    acc = jnp.zeros((toh * ow8, tn), jnp.float32)
    for i in range(kh):
        for j in range(kw):
            a = x_ref[pl.ds(row0 + i, toh), pl.ds(j, ow8), :]
            acc = acc + jnp.dot(a.reshape(toh * ow8, cin), w_ref[i * kw + j],
                                preferred_element_type=jnp.float32)
    y = acc + shift_ref[...]
    if relu:
        y = jnp.maximum(y, 0.0)
    y = y.reshape(toh, ow8, tn)[:, :ow, :]   # drop the ow8-OW garbage columns
    o_ref[...] = y.astype(o_ref.dtype)


# --------------------------- Pallas wrappers ---------------------------------

def matmul_bias_act(a, b, shift, *, relu, residual=None, out_dtype=ACT_DTYPE):
    """(M,K)@(K,N) in bf16 with f32 accumulation; fused per-column shift,
    optional residual add and ReLU in the epilogue."""
    M, K = a.shape
    _, N = b.shape
    # ---- tile selection ------------------------------------------------
    tn = N if N <= 256 else (256 if N % 256 == 0 else 128)
    Np = _round_up(N, tn)
    if K <= 2048:                       # single K step: the common case here
        tk = K
    else:
        tk = _pick_tile(K, (2048, 1536, 1152, 1024, 768, 640, 512)) or 512
    Kp = _round_up(K, tk)
    if M <= 512:
        tm = M
    else:
        tm = _pick_tile(M, (512, 384, 256, 128)) or 256
    Mp = _round_up(M, tm)
    # v7x: guarantee >=2 parallel blocks so both TensorCores get work.
    if (Np // tn) * (Mp // tm) == 1 and M >= 16:
        Mp = _round_up(M, 16)
        tm = Mp // 2

    a_p = a if (Mp, Kp) == (M, K) else jnp.pad(a, ((0, Mp - M), (0, Kp - K)))
    b_p = b if (Kp, Np) == (K, N) else jnp.pad(b, ((0, Kp - K), (0, Np - N)))
    s_p = shift if Np == N else jnp.pad(shift, ((0, 0), (0, Np - N)))

    has_res = residual is not None
    if has_res:
        r_p = residual if residual.shape == (Mp, Np) else jnp.pad(
            residual, ((0, Mp - M), (0, Np - N)))
        inputs = [a_p, b_p, s_p, r_p]
    else:
        inputs = [a_p, b_p, s_p]

    nsteps_k = Kp // tk
    vmem = _vmem_limit(tm * tk * 2, tk * tn * 2, tm * tn * 2, tm * tn * 4,
                       tm * tn * 2 if has_res else 0)

    if nsteps_k == 1:
        in_specs = [
            pl.BlockSpec((tm, tk), lambda j, i: (i, 0)),
            pl.BlockSpec((tk, tn), lambda j, i: (0, j)),
            pl.BlockSpec((1, tn), lambda j, i: (0, j)),
        ]
        if has_res:
            in_specs.append(pl.BlockSpec((tm, tn), lambda j, i: (i, j)))
        out = pl.pallas_call(
            functools.partial(_mm_single_kernel, relu=relu, has_res=has_res),
            out_shape=jax.ShapeDtypeStruct((Mp, Np), out_dtype),
            grid_spec=pltpu.PrefetchScalarGridSpec(
                num_scalar_prefetch=0,
                grid=(Np // tn, Mp // tm),
                in_specs=in_specs,
                out_specs=pl.BlockSpec((tm, tn), lambda j, i: (i, j)),
            ),
            compiler_params=pltpu.CompilerParams(
                dimension_semantics=("parallel", "parallel"),
                vmem_limit_bytes=vmem),
        )(*inputs)
    else:
        in_specs = [
            pl.BlockSpec((tm, tk), lambda j, i, k: (i, k)),
            pl.BlockSpec((tk, tn), lambda j, i, k: (k, j)),
            pl.BlockSpec((1, tn), lambda j, i, k: (0, j)),
        ]
        if has_res:
            in_specs.append(pl.BlockSpec((tm, tn), lambda j, i, k: (i, j)))
        out = pl.pallas_call(
            functools.partial(_mm_multi_kernel, relu=relu, has_res=has_res),
            out_shape=jax.ShapeDtypeStruct((Mp, Np), out_dtype),
            grid_spec=pltpu.PrefetchScalarGridSpec(
                num_scalar_prefetch=0,
                grid=(Np // tn, Mp // tm, nsteps_k),
                in_specs=in_specs,
                out_specs=pl.BlockSpec((tm, tn), lambda j, i, k: (i, j)),
                scratch_shapes=[pltpu.VMEM((tm, tn), jnp.float32)],
            ),
            compiler_params=pltpu.CompilerParams(
                dimension_semantics=("parallel", "parallel", "arbitrary"),
                vmem_limit_bytes=vmem),
        )(*inputs)

    if (Mp, Np) != (M, N):
        out = out[:M, :N]
    return out


def _conv_row_tile(oh, ow8, tn, budget=96 * 1024):
    """Largest divisor of OH keeping the f32 accumulator within the vreg file."""
    max_rows = max(1, budget // (ow8 * tn * 4))
    t = max(1, min(oh, max_rows, 16))
    while oh % t:
        t -= 1
    return t


def conv3x3_bn_act(x, w_packed, shift, *, relu=True):
    """3x3 / stride-1 / pad-1 conv + BN shift + ReLU as an implicit-GEMM Pallas
    kernel (no HBM im2col).  x: (N,H,W,Cin) bf16; w_packed: (9,Cin,Cout) bf16
    with the BN scale already folded in."""
    N, H, W, Cin = x.shape
    taps, _, Cout = w_packed.shape
    KH = KW = 3
    OH, OW = H, W
    ow8 = _round_up(OW, 8)
    # pad 1 row top/bottom, 1 col left, (ow8-W+1) cols right so every tap of the
    # rounded-up output width stays in-bounds (extra columns are zeros).
    x_pad = jnp.pad(x, ((0, 0), (1, 1), (1, 1 + ow8 - W), (0, 0)))
    Hp, Wp = H + 2, ow8 + 2
    tn = Cout if Cout <= 256 else 256
    toh = _conv_row_tile(OH, ow8, tn)
    vmem = _vmem_limit(Hp * Wp * Cin * 2, taps * Cin * tn * 2, toh * OW * tn * 2)

    return pl.pallas_call(
        functools.partial(_conv_s1_kernel, kh=KH, kw=KW, ow8=ow8, relu=relu),
        out_shape=jax.ShapeDtypeStruct((N, OH, OW, Cout), ACT_DTYPE),
        grid_spec=pltpu.PrefetchScalarGridSpec(
            num_scalar_prefetch=0,
            # Cout tile outermost: the (9, Cin, tn) weight block is fetched once
            # per Cout tile and reused across the whole batch / all row tiles.
            grid=(Cout // tn, N, OH // toh),
            in_specs=[
                pl.BlockSpec((None, Hp, Wp, Cin), lambda j, n, r: (n, 0, 0, 0)),
                pl.BlockSpec((taps, Cin, tn), lambda j, n, r: (0, 0, j)),
                pl.BlockSpec((1, tn), lambda j, n, r: (0, j)),
            ],
            out_specs=pl.BlockSpec((None, toh, OW, tn),
                                   lambda j, n, r: (n, r, 0, j)),
        ),
        compiler_params=pltpu.CompilerParams(
            dimension_semantics=("parallel", "parallel", "parallel"),
            vmem_limit_bytes=vmem),
    )(x_pad, w_packed, shift)


def conv_im2col_bn_act(x, w_mat, shift, kh, kw, stride, padding, *, relu):
    # TODO(synk): the 4 strided convs (7x7/s2 stem + three 3x3/s2) keep a
    # JAX-side output-sized im2col feeding the fused Pallas GEMM; all stride-1
    # 3x3 convs (the hot path) run the implicit-GEMM kernel above.
    N, H, W, Cin = x.shape
    Cout = w_mat.shape[1]
    if padding:
        x = jnp.pad(x, ((0, 0), (padding, padding), (padding, padding), (0, 0)))
    OH = (H + 2 * padding - kh) // stride + 1
    OW = (W + 2 * padding - kw) // stride + 1
    cols = []
    for i in range(kh):
        for j in range(kw):
            cols.append(x[:, i:i + (OH - 1) * stride + 1:stride,
                          j:j + (OW - 1) * stride + 1:stride, :])
    a = jnp.concatenate(cols, axis=-1).reshape(N * OH * OW, kh * kw * Cin)
    out = matmul_bias_act(a, w_mat, shift, relu=relu)
    return out.reshape(N, OH, OW, Cout)


def maxpool2d(x, ksize=3, stride=2, padding=1):
    # TODO(synk): max-pool window extraction kept in plain JAX (tiny, not the hot path).
    N, H, W, C = x.shape
    x = jnp.pad(x, ((0, 0), (padding, padding), (padding, padding), (0, 0)),
                constant_values=-np.inf)
    OH = (H + 2 * padding - ksize) // stride + 1
    OW = (W + 2 * padding - ksize) // stride + 1
    out = None
    for i in range(ksize):
        for j in range(ksize):
            s = x[:, i:i + (OH - 1) * stride + 1:stride,
                  j:j + (OW - 1) * stride + 1:stride, :]
            out = s if out is None else jnp.maximum(out, s)
    return out


# --------------------------- parameters --------------------------------------

def make_params(key):
    """Raw PyTorch-style parameters: conv weights (KH,KW,Cin,Cout) + inference
    BN represented as per-channel (scale, shift)."""
    counter = [0]

    def nk():
        counter[0] += 1
        return jax.random.fold_in(key, counter[0])

    def conv_w(kh, kw, cin, cout):
        fan_in = kh * kw * cin
        return jax.random.normal(nk(), (kh, kw, cin, cout),
                                 jnp.float32) * np.sqrt(2.0 / fan_in)

    def bn(c):
        # inference BN with gamma=1, beta=0, running_mean=0, running_var=1
        return (jnp.full((c,), 1.0 / np.sqrt(1.0 + BN_EPS), jnp.float32),
                jnp.zeros((c,), jnp.float32))

    params = {'conv1_w': conv_w(7, 7, 3, 64)}
    params['bn1_s'], params['bn1_b'] = bn(64)

    expansion = 4
    inplanes = 64
    layers = []
    for planes, nblocks, stride in LAYER_CFG:
        blocks = []
        for bi in range(nblocks):
            s = stride if bi == 0 else 1
            blk = {'conv1_w': conv_w(1, 1, inplanes, planes)}
            blk['bn1_s'], blk['bn1_b'] = bn(planes)
            blk['conv2_w'] = conv_w(3, 3, planes, planes)
            blk['bn2_s'], blk['bn2_b'] = bn(planes)
            blk['conv3_w'] = conv_w(1, 1, planes, planes * expansion)
            blk['bn3_s'], blk['bn3_b'] = bn(planes * expansion)
            if bi == 0 and (s != 1 or inplanes != planes * expansion):
                blk['down_w'] = conv_w(1, 1, inplanes, planes * expansion)
                blk['down_s'], blk['down_b'] = bn(planes * expansion)
            blocks.append(blk)
            inplanes = planes * expansion
        layers.append(blocks)
    params['layers'] = layers

    # final_layer = conv1x1(2048, 174, bias=True); torch inits weight & bias to 0
    params['final_w'] = jnp.zeros((1, 1, LAST_DIM, RIG_DIM), jnp.float32)
    params['final_b'] = jnp.zeros((RIG_DIM,), jnp.float32)
    return params


def _pad2d(w, k_to, n_to):
    K, N = w.shape
    if (K, N) != (k_to, n_to):
        w = jnp.pad(w, ((0, k_to - K), (0, n_to - N)))
    return w


def _pad_bias(b, n_to):
    b = b.reshape(1, -1)
    if b.shape[1] != n_to:
        b = jnp.pad(b, ((0, 0), (0, n_to - b.shape[1])))
    return b.astype(jnp.float32)


def pack_params(raw):
    """One-time weight packing (outside the forward path): fold the BN scale into
    the conv weights, zero-pad every sub-128 channel dim to 128 so all kernel
    outputs are lane-dense, reshape to the kernels' GEMM layouts, cast to bf16."""
    packed = {}
    # stem 7x7: (7,7,3,64) -> (147, 64), Cout padded to 128
    c_stem = _round_up(64, LANE)
    w = raw['conv1_w'] * raw['bn1_s'][None, None, None, :]
    packed['stem_w'] = _pad2d(w.reshape(7 * 7 * 3, 64), 7 * 7 * 3, c_stem).astype(ACT_DTYPE)
    packed['stem_b'] = _pad_bias(raw['bn1_b'], c_stem)

    expansion = 4
    cin_raw, cin_pad = 64, c_stem
    layers = []
    for (planes, nblocks, stride), blocks in zip(LAYER_CFG, raw['layers']):
        p_pad = _round_up(planes, LANE)
        out_raw = planes * expansion
        out_pad = _round_up(out_raw, LANE)
        pblocks = []
        for bi, blk in enumerate(blocks):
            s = stride if bi == 0 else 1
            p = {}
            w1 = blk['conv1_w'].reshape(cin_raw, planes) * blk['bn1_s'][None, :]
            p['w1'] = _pad2d(w1, cin_pad, p_pad).astype(ACT_DTYPE)
            p['b1'] = _pad_bias(blk['bn1_b'], p_pad)

            w2 = (blk['conv2_w'] * blk['bn2_s'][None, None, None, :]).reshape(9, planes, planes)
            w2 = jnp.pad(w2, ((0, 0), (0, p_pad - planes), (0, p_pad - planes)))
            if s == 1:
                p['w2'] = w2.astype(ACT_DTYPE)                              # implicit GEMM
            else:
                p['w2'] = w2.reshape(9 * p_pad, p_pad).astype(ACT_DTYPE)    # im2col GEMM
            p['b2'] = _pad_bias(blk['bn2_b'], p_pad)

            w3 = blk['conv3_w'].reshape(planes, out_raw) * blk['bn3_s'][None, :]
            p['w3'] = _pad2d(w3, p_pad, out_pad).astype(ACT_DTYPE)
            p['b3'] = _pad_bias(blk['bn3_b'], out_pad)

            if 'down_w' in blk:
                wd = blk['down_w'].reshape(cin_raw, out_raw) * blk['down_s'][None, :]
                p['wd'] = _pad2d(wd, cin_pad, out_pad).astype(ACT_DTYPE)
                p['bd'] = _pad_bias(blk['down_b'], out_pad)
            pblocks.append(p)
            cin_raw, cin_pad = out_raw, out_pad
        layers.append(pblocks)
    packed['layers'] = layers

    packed['final_w'] = raw['final_w'].reshape(LAST_DIM, RIG_DIM).astype(ACT_DTYPE)
    packed['final_b'] = raw['final_b'].reshape(1, RIG_DIM).astype(jnp.float32)
    return packed


# --------------------------- forward ------------------------------------------

def bottleneck(x, blk, stride):
    N, H, W, Cin = x.shape
    planes = blk['w1'].shape[1]
    # 1x1 conv + BN + ReLU (fused matmul epilogue)
    out = matmul_bias_act(x.reshape(N * H * W, Cin), blk['w1'], blk['b1'], relu=True)
    out = out.reshape(N, H, W, planes)
    # 3x3 conv + BN + ReLU
    if stride == 1:
        out = conv3x3_bn_act(out, blk['w2'], blk['b2'], relu=True)
    else:
        out = conv_im2col_bn_act(out, blk['w2'], blk['b2'], 3, 3, stride, 1, relu=True)
    N2, OH, OW, _ = out.shape
    # identity path
    if 'wd' in blk:
        xs = x[:, ::stride, ::stride, :] if stride > 1 else x
        identity = matmul_bias_act(xs.reshape(N2 * OH * OW, Cin),
                                   blk['wd'], blk['bd'], relu=False)
    else:
        identity = x.reshape(N * H * W, Cin)
    # 1x1 conv + BN + residual add + ReLU, all fused in the matmul epilogue
    out = matmul_bias_act(out.reshape(N2 * OH * OW, planes), blk['w3'], blk['b3'],
                          relu=True, residual=identity)
    return out.reshape(N2, OH, OW, blk['w3'].shape[1])


def retarget_net_forward(params, x_nchw):
    # input is NCHW (PyTorch convention); NHWC / bf16 activations internally.
    x = jnp.transpose(x_nchw, (0, 2, 3, 1)).astype(ACT_DTYPE)
    # stem: 7x7/s2/p3 conv + BN + ReLU (K=147 => single K step), then 3x3/s2 maxpool
    x = conv_im2col_bn_act(x, params['stem_w'], params['stem_b'], 7, 7, 2, 3, relu=True)
    x = maxpool2d(x)
    for (planes, nblocks, stride), blocks in zip(LAYER_CFG, params['layers']):
        for bi, blk in enumerate(blocks):
            x = bottleneck(x, blk, stride if bi == 0 else 1)
    # adaptive avg pool to (1,1); backbone returns (N, 2048, 1, 1) when use_last_fc=False
    feat = jnp.mean(x.astype(jnp.float32), axis=(1, 2)).astype(ACT_DTYPE)   # (N, 2048)
    # final 1x1 conv with bias == matmul; torch.flatten(x, 1) -> (N, 174)
    out = matmul_bias_act(feat, params['final_w'], params['final_b'],
                          relu=False, out_dtype=jnp.float32)
    return out


# --------------------------- self test / main ---------------------------------

def _selftest():
    key = jax.random.PRNGKey(0)
    f32 = jnp.float32

    # fused GEMM epilogue (single-K path, residual + relu)
    a = jax.random.normal(jax.random.fold_in(key, 10), (96, 160), f32).astype(ACT_DTYPE)
    b = jax.random.normal(jax.random.fold_in(key, 11), (160, 256), f32).astype(ACT_DTYPE)
    s = jax.random.normal(jax.random.fold_in(key, 12), (1, 256), f32) * 0.1
    r = jax.random.normal(jax.random.fold_in(key, 13), (96, 256), f32).astype(ACT_DTYPE)
    got = matmul_bias_act(a, b, s, relu=True, residual=r).astype(f32)
    ref = jnp.maximum(a.astype(f32) @ b.astype(f32) + s + r.astype(f32), 0.0)
    assert bool(jnp.allclose(got, ref, atol=5e-2, rtol=5e-2)), "matmul single-K mismatch"

    # multi-K path
    a2 = jax.random.normal(jax.random.fold_in(key, 14), (32, 3072), f32).astype(ACT_DTYPE)
    b2 = (jax.random.normal(jax.random.fold_in(key, 15), (3072, 256), f32) * 0.02).astype(ACT_DTYPE)
    s2 = jnp.zeros((1, 256), f32)
    got2 = matmul_bias_act(a2, b2, s2, relu=False).astype(f32)
    ref2 = a2.astype(f32) @ b2.astype(f32)
    assert bool(jnp.allclose(got2, ref2, atol=5e-2, rtol=5e-2)), "matmul multi-K mismatch"

    # implicit-GEMM 3x3/s1 conv (exact-width and width-rounded paths)
    for hw in (8, 4):
        xc = jax.random.normal(jax.random.fold_in(key, 20 + hw), (2, hw, hw, 128), f32).astype(ACT_DTYPE)
        wc = (jax.random.normal(jax.random.fold_in(key, 30 + hw), (9, 128, 128), f32) * 0.05).astype(ACT_DTYPE)
        sc = jax.random.normal(jax.random.fold_in(key, 40 + hw), (1, 128), f32) * 0.1
        got3 = conv3x3_bn_act(xc, wc, sc, relu=True).astype(f32)
        xp = jnp.pad(xc.astype(f32), ((0, 0), (1, 1), (1, 1), (0, 0)))
        acc = jnp.zeros((2, hw, hw, 128), f32)
        for i in range(3):
            for j in range(3):
                acc = acc + jnp.einsum('nhwc,ck->nhwk',
                                       xp[:, i:i + hw, j:j + hw, :],
                                       wc[i * 3 + j].astype(f32))
        ref3 = jnp.maximum(acc + sc.reshape(1, 1, 1, -1), 0.0)
        assert bool(jnp.allclose(got3, ref3, atol=5e-2, rtol=5e-2)), f"conv3x3 mismatch hw={hw}"


if __name__ == "__main__":
    _selftest()

    key = jax.random.PRNGKey(0)
    raw = make_params(jax.random.fold_in(key, 1))
    params = pack_params(raw)      # one-time BN fold + channel pad + bf16 packing
    # small image consistent with the conv net: batch=2, 3 channels, 32x32 spatial
    x = jax.random.normal(jax.random.fold_in(key, 2), (2, 3, 32, 32), jnp.float32)

    fwd = jax.jit(retarget_net_forward)
    y = jax.block_until_ready(fwd(params, x))

    assert y.shape == (2, RIG_DIM), y.shape
    assert bool(jnp.all(jnp.isfinite(y)))
    # final_layer weight & bias are constant-0 (as in the PyTorch __init__) -> output is 0
    assert bool(jnp.all(y == 0.0))
    print("KERNEL_OK")
</pallas_src>

<mosaic_0001>
module attributes {stable_mosaic.version = 11 : i64} {
  func.func @_mm_single_kernel(%arg0: i32, %arg1: i32, %arg2: memref<48x160xbf16, #tpu.memory_space<vmem>>, %arg3: memref<160x256xbf16, #tpu.memory_space<vmem>>, %arg4: memref<1x256xf32, #tpu.memory_space<vmem>>, %arg5: memref<48x256xbf16, #tpu.memory_space<vmem>>, %arg6: memref<48x256xbf16, #tpu.memory_space<vmem>>) attributes {dimension_semantics = [#tpu.dimension_semantics<parallel>, #tpu.dimension_semantics<parallel>], iteration_bounds = array<i64: 1, 2>, scalar_prefetch = 0 : i64, scratch_operands = 0 : i64, tpu.core_type = #tpu.core_type<tc>, window_params = [{transform_indices = @transform_0, window_bounds = array<i64: 48, 160>}, {transform_indices = @transform_1, window_bounds = array<i64: 160, 256>}, {transform_indices = @transform_2, window_bounds = array<i64: 1, 256>}, {transform_indices = @transform_3, window_bounds = array<i64: 48, 256>}, {transform_indices = @transform_4, window_bounds = array<i64: 48, 256>}]} {
    %c0 = arith.constant 0 : index
    %c0_0 = arith.constant 0 : index
    %0 = vector.load %arg2[%c0, %c0_0] : memref<48x160xbf16, #tpu.memory_space<vmem>>, vector<48x160xbf16>
    %c0_1 = arith.constant 0 : index
    %c0_2 = arith.constant 0 : index
    %1 = vector.load %arg3[%c0_1, %c0_2] : memref<160x256xbf16, #tpu.memory_space<vmem>>, vector<160x256xbf16>
    %cst = arith.constant dense<0.000000e+00> : vector<48x256xf32>
    %2 = tpu.matmul %0, %1, %cst {dimension_numbers = #tpu.dot_dimension_numbers<[1], [0], [0], [1], [0, 0, 1, 1], [], []>} : vector<48x160xbf16>, vector<160x256xbf16>, vector<48x256xf32> -> vector<48x256xf32>
    %c0_3 = arith.constant 0 : index
    %c0_4 = arith.constant 0 : index
    %3 = vector.load %arg4[%c0_3, %c0_4] : memref<1x256xf32, #tpu.memory_space<vmem>>, vector<1x256xf32>
    %4 = vector.broadcast %3 : vector<1x256xf32> to vector<48x256xf32>
    %5 = arith.addf %2, %4 : vector<48x256xf32>
    %c0_5 = arith.constant 0 : index
    %c0_6 = arith.constant 0 : index
    %6 = vector.load %arg5[%c0_5, %c0_6] : memref<48x256xbf16, #tpu.memory_space<vmem>>, vector<48x256xbf16>
    %7 = arith.extf %6 : vector<48x256xbf16> to vector<48x256xf32>
    %8 = arith.addf %5, %7 : vector<48x256xf32>
    %cst_7 = arith.constant 0.000000e+00 : f32
    %9 = vector.broadcast %cst_7 : f32 to vector<48x256xf32>
    %10 = arith.maximumf %8, %9 : vector<48x256xf32>
    %11 = arith.truncf %10 : vector<48x256xf32> to vector<48x256xbf16>
    %c0_8 = arith.constant 0 : index
    %c0_9 = arith.constant 0 : index
    %12 = vector.load %arg6[%c0_8, %c0_9] : memref<48x256xbf16, #tpu.memory_space<vmem>>, vector<48x256xbf16>
    tpu.vector_store %arg6[%c0_8, %c0_9], %11 {strides = array<i32>} : memref<48x256xbf16, #tpu.memory_space<vmem>>, vector<48x256xbf16>,
    return
  }
  func.func @transform_0(%arg0: i32, %arg1: i32) -> (i32, i32) {
    %c0_i32 = arith.constant 0 : i32
    %c0_i32_0 = arith.constant 0 : i32
    return %arg1, %c0_i32 : i32, i32
  }
  func.func @transform_1(%arg0: i32, %arg1: i32) -> (i32, i32) {
    %c0_i32 = arith.constant 0 : i32
    %c0_i32_0 = arith.constant 0 : i32
    return %c0_i32, %arg0 : i32, i32
  }
  func.func @transform_2(%arg0: i32, %arg1: i32) -> (i32, i32) {
    %c0_i32 = arith.constant 0 : i32
    %c0_i32_0 = arith.constant 0 : i32
    return %c0_i32, %arg0 : i32, i32
  }
  func.func @transform_3(%arg0: i32, %arg1: i32) -> (i32, i32) {
    %c0_i32 = arith.constant 0 : i32
    return %arg1, %arg0 : i32, i32
  }
  func.func @transform_4(%arg0: i32, %arg1: i32) -> (i32, i32) {
    %c0_i32 = arith.constant 0 : i32
    return %arg1, %arg0 : i32, i32
  }
}

</mosaic_0001>

<llo_original>
// kernel: tpu_custom_call.1
$region0: #{tpu_custom_call.1}
  #allocation0 [shape = 'u32[]', space=smem, size = 0x4, offset = 0x4, fixed_abs, tag = 'smem constant byte address 0x4 - core index']
  #allocation1 [shape = 'u32[72,128]{1,0:T(1,128)}', space=vmem, size = 0x9000, scoped, tag = 'internal scratch']
  %s0 = inlined_call_operand.vmem [shape: bf16[96,160], index: 0, kind: input, shape index: {}]
  %s1 = inlined_call_operand.vmem [shape: bf16[160,256], index: 1, kind: input, shape index: {}]
  %s2 = inlined_call_operand.vmem [shape: f32[1,256], index: 2, kind: input, shape index: {}]
  %s3 = inlined_call_operand.hbm [shape: bf16[96,256], index: 3, kind: input, shape index: {}]
  %s4 = inlined_call_operand.hbm [shape: bf16[96,256], index: 4, kind: output, shape index: {}]
  %s5 = sld [smem:[#allocation0]]
  $region53: #{tpu_custom_call.1} parent=0
    _
  %s7 = ssub.s32 1, %s5
  %s8 = scalar_select 0, %s7, %s5
  $region1: #{tpu_custom_call.1} parent=0
    #allocation2 [shape = 'u8[49152]{0}', space=vmem, size = 0xc000, scoped, tag = 'input window, operand 3']
    #allocation3 [shape = 's32[2]{0}', space=sflag, size = 0x8, scoped, tag = 'scoped memory for tpu_custom_call.1']
    #allocation4 [shape = 's32[2]{0}', space=sflag, size = 0x8, scoped, tag = 'scoped memory for tpu_custom_call.1']
    #allocation5 [shape = 'u8[49152]{0}', space=vmem, size = 0xc000, scoped, tag = 'output window, operand 0']
    %9 = vsyncpa [#allocation3], 0
    %s10 = scalar_lea.sflag [#allocation3], 1
    %11 = vsyncpa %s10, 0
    %12 = vsyncpa [#allocation4], 0
    %s13 = scalar_lea.sflag [#allocation4], 1
    %14 = vsyncpa %s13, 0
    loop: start=0, step=1, limit=4
    $region2: #{tpu_custom_call.1} parent=1 // loop_pre_header
      _
    $region3: #{tpu_custom_call.1} parent=1 // loop_header
      %s16 = sphi 0, %s20
      %p17 = scmp.ge.s32.totalorder %s16, 4
      %s23 = sphi 0, %s35
      %s24 = sphi 0, %s31
      %s25 = sphi 0, %s23
      %s26 = sphi 0, %s24
      %s27 = sphi 0, %s25
      %s28 = sphi 0, %s26
      %s38 = sphi 0, %s40
      %s41 = sphi 0, %s38
      %s42 = sphi 0, %s41
      %s58 = sphi 0, %s42
      %s64 = sphi 0, %s66
      %s67 = sphi 0, %s64
      %s68 = sphi 0, %s67
      %s84 = sphi 0, %s68
      %s90 = sphi 0, %s92
      %s93 = sphi 0, %s90
      %s94 = sphi 0, %s93
      %s110 = sphi 0, %s94
      %s118 = sphi 0, %s120
      %s121 = sphi 0, %s118
      %s122 = sphi 0, %s121
      %s138 = sphi 0, %s122
      %s146 = sphi 0, %s148
      %s149 = sphi 0, %s146
      %s150 = sphi 0, %s149
      %s166 = sphi 0, %s150
    $region4: #{tpu_custom_call.1} parent=1 // loop_header_branch
      %19 = sbr.rel (%p17) target = $region8
    $region5: #{tpu_custom_call.1} parent=1 // loop_body
      %s21 = ssub.s32 %s16, 1
      %s22 = ssub.s32 %s16, 2
      %s29 = sadd.s32 1, %s24
      %p30 = scmp.ge.s32.totalorder %s29, 2
      %s31 = scalar_select %p30, 0, %s29
      %s32 = sadd.s32 1, %s23
      %s33 = scalar_select %p30, %s32, %s23
      %p34 = scmp.ge.s32.totalorder %s33, 1
      %s35 = scalar_select %p34, 0, %s33
      %s36 = ssub.s32 %s24, %s31
      %p37 = scmp.eq.s32.totalorder %s36, 0
      %s39 = sadd.s32 %s38, 1
      %s40 = scalar_select %p37, %s38, %s39
      %p43 = pneg %p37
      %p44 = scmp.eq.s32.totalorder %s16, 1
      %p45 = por %p43, %p44
      %p46 = scmp.ne.s32.totalorder %s38, %s41
      %p47 = scmp.eq.s32.totalorder %s16, 0
      %p48 = por %p46, %p47
      %p49 = scmp.ne.s32.totalorder %s38, %s41
      %p50 = scmp.eq.s32.totalorder %s21, 1
      %p51 = por %p49, %p50
      %p52 = scmp.ne.s32.totalorder %s41, %s42
      %p53 = scmp.eq.s32.totalorder %s21, 0
      %p54 = por %p52, %p53
      %p55 = scmp.ne.s32.totalorder %s41, %s42
      %p56 = scmp.eq.s32.totalorder %s22, 1
      %p57 = por %p55, %p56
      %p59 = scmp.ne.s32.totalorder %s42, %s58
      %p60 = scmp.eq.s32.totalorder %s22, 0
      %p61 = por %p59, %p60
      %s62 = ssub.s32 %s23, %s35
      %p63 = scmp.eq.s32.totalorder %s62, 0
      %s65 = sadd.s32 %s64, 1
      %s66 = scalar_select %p63, %s64, %s65
      %p69 = pneg %p63
      %p70 = scmp.eq.s32.totalorder %s16, 1
      %p71 = por %p69, %p70
      %p72 = scmp.ne.s32.totalorder %s64, %s67
      %p73 = scmp.eq.s32.totalorder %s16, 0
      %p74 = por %p72, %p73
      %p75 = scmp.ne.s32.totalorder %s64, %s67
      %p76 = scmp.eq.s32.totalorder %s21, 1
      %p77 = por %p75, %p76
      %p78 = scmp.ne.s32.totalorder %s67, %s68
      %p79 = scmp.eq.s32.totalorder %s21, 0
      %p80 = por %p78, %p79
      %p81 = scmp.ne.s32.totalorder %s67, %s68
      %p82 = scmp.eq.s32.totalorder %s22, 1
      %p83 = por %p81, %p82
      %p85 = scmp.ne.s32.totalorder %s68, %s84
      %p86 = scmp.eq.s32.totalorder %s22, 0
      %p87 = por %p85, %p86
      %s88 = ssub.s32 %s23, %s35
      %p89 = scmp.eq.s32.totalorder %s88, 0
      %s91 = sadd.s32 %s90, 1
      %s92 = scalar_select %p89, %s90, %s91
      %p95 = pneg %p89
      %p96 = scmp.eq.s32.totalorder %s16, 1
      %p97 = por %p95, %p96
      %p98 = scmp.ne.s32.totalorder %s90, %s93
      %p99 = scmp.eq.s32.totalorder %s16, 0
      %p100 = por %p98, %p99
      %p101 = scmp.ne.s32.totalorder %s90, %s93
      %p102 = scmp.eq.s32.totalorder %s21, 1
      %p103 = por %p101, %p102
      %p104 = scmp.ne.s32.totalorder %s93, %s94
      %p105 = scmp.eq.s32.totalorder %s21, 0
      %p106 = por %p104, %p105
      %p107 = scmp.ne.s32.totalorder %s93, %s94
      %p108 = scmp.eq.s32.totalorder %s22, 1
      %p109 = por %p107, %p108
      %p111 = scmp.ne.s32.totalorder %s94, %s110
      %p112 = scmp.eq.s32.totalorder %s22, 0
      %p113 = por %p111, %p112
      %s114 = ssub.s32 %s24, %s31
      %s115 = ssub.s32 %s23, %s35
      %s116 = sor.u32 %s114, %s115
      %p117 = scmp.eq.s32.totalorder %s116, 0
      %s119 = sadd.s32 %s118, 1
      %s120 = scalar_select %p117, %s118, %s119
      %p123 = pneg %p117
      %p124 = scmp.eq.s32.totalorder %s16, 1
      %p125 = por %p123, %p124
      %p126 = scmp.ne.s32.totalorder %s118, %s121
      %p127 = scmp.eq.s32.totalorder %s16, 0
      %p128 = por %p126, %p127
      %p129 = scmp.ne.s32.totalorder %s118, %s121
      %p130 = scmp.eq.s32.totalorder %s21, 1
      %p131 = por %p129, %p130
      %p132 = scmp.ne.s32.totalorder %s121, %s122
      %p133 = scmp.eq.s32.totalorder %s21, 0
      %p134 = por %p132, %p133
      %p135 = scmp.ne.s32.totalorder %s121, %s122
      %p136 = scmp.eq.s32.totalorder %s22, 1
      %p137 = por %p135, %p136
      %p139 = scmp.ne.s32.totalorder %s122, %s138
      %p140 = scmp.eq.s32.totalorder %s22, 0
      %p141 = por %p139, %p140
      %s142 = ssub.s32 %s24, %s31
      %s143 = ssub.s32 %s23, %s35
      %s144 = sor.u32 %s142, %s143
      %p145 = scmp.eq.s32.totalorder %s144, 0
      %s147 = sadd.s32 %s146, 1
      %s148 = scalar_select %p145, %s146, %s147
      %p151 = pneg %p145
      %p152 = scmp.eq.s32.totalorder %s16, 1
      %p153 = por %p151, %p152
      %p154 = scmp.ne.s32.totalorder %s146, %s149
      %p155 = scmp.eq.s32.totalorder %s16, 0
      %p156 = por %p154, %p155
      %p157 = scmp.ne.s32.totalorder %s146, %s149
      %p158 = scmp.eq.s32.totalorder %s21, 1
      %p159 = por %p157, %p158
      %p160 = scmp.ne.s32.totalorder %s149, %s150
      %p161 = scmp.eq.s32.totalorder %s21, 0
      %p162 = por %p160, %p161
      %p163 = scmp.ne.s32.totalorder %s149, %s150
      %p164 = scmp.eq.s32.totalorder %s22, 1
      %p165 = por %p163, %p164
      %p167 = scmp.ne.s32.totalorder %s150, %s166
      %p168 = scmp.eq.s32.totalorder %s22, 0
      %p169 = por %p167, %p168
      %p170 = scmp.le.s32.totalorder 1, %s16
      %p171 = scmp.lt.s32.totalorder %s16, 3
      %p172 = pnand %p170, %p171
      %p173 = pneg %p172
      // Predicated region
      $region9: #{tpu_custom_call.1} parent=5 // pred_check
        _
      $region10: #{tpu_custom_call.1} parent=5 // pred_check_branch
        %175 = sbr.rel (%p172) target = $region12
      $region11: #{tpu_custom_call.1} parent=5 // pred_region
        %s176 = ssub.s32 %s16, 1
        // Predicated region
        $region13: #{tpu_custom_call.1} parent=11 // pred_check
          %p177 = pneg %p80
        $region14: #{tpu_custom_call.1} parent=11 // pred_check_branch
          %179 = sbr.rel (%p177) target = $region16
        $region15: #{tpu_custom_call.1} parent=11 // pred_region
          %s180 = smul.u32 2, %s25
          %p181 = scmp.lt.s32.totalorder %s180, 1
          %s182 = scalar_select %p181, %s180, 1
          %s183 = smul.addr %s182, 4
          %s184 = scalar_lea.vmem %s1, %s183
          %s185 = smul.u32 2, %s25
        $region16: #{tpu_custom_call.1} parent=11 // pred_fallthru
          _
        // Predicated region
        $region17: #{tpu_custom_call.1} parent=11 // pred_check
          %p186 = pneg %p106
        $region18: #{tpu_custom_call.1} parent=11 // pred_check_branch
          %188 = sbr.rel (%p186) target = $region20
        $region19: #{tpu_custom_call.1} parent=11 // pred_region
          %s189 = smul.u32 2, %s25
          %p190 = scmp.lt.s32.totalorder %s189, 1
          %s191 = scalar_select %p190, %s189, 1
          %s192 = scalar_lea.vmem %s2, %s191
          %s193 = smul.u32 2, %s25
        $region20: #{tpu_custom_call.1} parent=11 // pred_fallthru
          _
      $region12: #{tpu_custom_call.1} parent=5 // pred_fallthru
        _
      %p194 = scmp.lt.s32.totalorder %s16, 2
      // Predicated region
      $region21: #{tpu_custom_call.1} parent=5 // pred_check
        %p195 = pneg %p194
      $region22: #{tpu_custom_call.1} parent=5 // pred_check_branch
        %197 = sbr.rel (%p195) target = $region24
      $region23: #{tpu_custom_call.1} parent=5 // pred_region
        // Predicated region
        $region25: #{tpu_custom_call.1} parent=23 // pred_check
          %p198 = pneg %p48
        $region26: #{tpu_custom_call.1} parent=23 // pred_check_branch
          %200 = sbr.rel (%p198) target = $region28
        $region27: #{tpu_custom_call.1} parent=23 // pred_region
          %s201 = smul.u32 6, %s24
          %p202 = scmp.lt.s32.totalorder %s201, 11
          %s203 = scalar_select %p202, %s201, 11
          %s204 = smul.addr %s203, 2
          %s205 = smul.addr %s204, 4
          %s206 = scalar_lea.vmem %s0, %s205
          %s207 = smul.u32 6, %s24
        $region28: #{tpu_custom_call.1} parent=23 // pred_fallthru
          _
        // Predicated region
        $region29: #{tpu_custom_call.1} parent=23 // pred_check
          %p208 = pneg %p128
        $region30: #{tpu_custom_call.1} parent=23 // pred_check_branch
          %210 = sbr.rel (%p208) target = $region32
        $region31: #{tpu_custom_call.1} parent=23 // pred_region
          %s211 = sand.u32 %s118, 1
          %s212 = scalar_lea.sflag [#allocation3], %s211
          %s213 = sand.u32 %s118, 1
          %s214 = smul.addr %s213, 48
          %s215 = scalar_lea.vmem [#allocation2], %s214
          %s216 = smul.u32 6, %s24
          %s217 = smul.u32 2, %s23
          %219 = vsyncadd %s212, 0
          %s220 = smul.addr %s216, 2
          %s221 = sadd.s32 %s217, %s220
          %s222 = smul.addr %s221, 4
          %s223 = scalar_lea.hbm %s3, %s222
          %s224 = sshll.u32 %s223, 4
          %s225 = int_to_ptr.hbm [resolvable:$true] %s224
          %s226 = sshll.u32 %s215, 4
          %s227 = int_to_ptr.vmem [resolvable:$true] %s226
          %232 = dma.hbm_to_vmem [thread:$0]  %s225, 768, %s227, %s212, 128, 128, 8
        $region32: #{tpu_custom_call.1} parent=23 // pred_fallthru
          _
      $region24: #{tpu_custom_call.1} parent=5 // pred_fallthru
        _
      %p233 = scmp.le.s32.totalorder 1, %s16
      %p234 = scmp.lt.s32.totalorder %s16, 3
      %p235 = pnand %p233, %p234
      %p236 = pneg %p235
      // Predicated region
      $region33: #{tpu_custom_call.1} parent=5 // pred_check
        _
      $region34: #{tpu_custom_call.1} parent=5 // pred_check_branch
        %238 = sbr.rel (%p235) target = $region36
      $region35: #{tpu_custom_call.1} parent=5 // pred_region
        %s239 = ssub.s32 %s16, 1
        %s240 = sand.u32 %s121, 1
        %s241 = scalar_lea.sflag [#allocation3], %s240
        %s242 = sand.u32 %s121, 1
        %s243 = smul.addr %s242, 48
        %s244 = scalar_lea.vmem [#allocation2], %s243
        // Predicated region
        $region37: #{tpu_custom_call.1} parent=35 // pred_check
          %p245 = pneg %p134
        $region38: #{tpu_custom_call.1} parent=35 // pred_check_branch
          %247 = sbr.rel (%p245) target = $region40
        $region39: #{tpu_custom_call.1} parent=35 // pred_region
          %249 = dma.done %s241, 768
        $region40: #{tpu_custom_call.1} parent=35 // pred_fallthru
          _
        %s250 = smul.u32 6, %s26
        %p251 = scmp.lt.s32.totalorder %s250, 11
        %s252 = scalar_select %p251, %s250, 11
        %s253 = smul.addr %s252, 2
        %s254 = smul.addr %s253, 4
        %s255 = scalar_lea.vmem %s0, %s254
        %p256 = pneg %p54
        %p257 = pneg %p51
        %s258 = smul.u32 2, %s25
        %p259 = scmp.lt.s32.totalorder %s258, 1
        %s260 = scalar_select %p259, %s258, 1
        %s261 = smul.addr %s260, 4
        %s262 = scalar_lea.vmem %s1, %s261
        %p263 = pneg %p80
        %p264 = pneg %p77
        %s265 = smul.u32 2, %s25
        %p266 = scmp.lt.s32.totalorder %s265, 1
        %s267 = scalar_select %p266, %s265, 1
        %s268 = scalar_lea.vmem %s2, %s267
        %p269 = pneg %p106
        %p270 = pneg %p103
        %s271 = sand.u32 %s121, 1
        %s272 = scalar_lea.sflag [#allocation3], %s271
        %s273 = sand.u32 %s121, 1
        %s274 = smul.addr %s273, 48
        %s275 = scalar_lea.vmem [#allocation2], %s274
        %p276 = pneg %p134
        %p277 = pneg %p131
        %p278 = pneg %p162
        %p279 = pneg %p159
        %s280 = sand.u32 %s149, 1
        %s281 = scalar_lea.sflag [#allocation4], %s280
        %s282 = sand.u32 %s149, 1
        %s283 = smul.addr %s282, 48
        %s284 = scalar_lea.vmem [#allocation5], %s283
        %s285 = smul.u32 6, %s26
        %p286 = scmp.lt.s32.totalorder %s285, 11
        %s287 = scalar_select %p286, %s285, 11
        %s288 = smul.addr %s287, 2
        %s289 = smul.addr %s288, 4
        %s290 = scalar_lea.vmem %s0, %s289
        %s291 = smul.u32 6, %s26
        %s292 = smul.u32 2, %s25
        %p293 = scmp.lt.s32.totalorder %s292, 1
        %s294 = scalar_select %p293, %s292, 1
        %s295 = smul.addr %s294, 4
        %s296 = scalar_lea.vmem %s1, %s295
        %s297 = smul.u32 2, %s25
        %s298 = smul.u32 2, %s25
        %p299 = scmp.lt.s32.totalorder %s298, 1
        %s300 = scalar_select %p299, %s298, 1
        %s301 = scalar_lea.vmem %s2, %s300
        %s302 = smul.u32 2, %s25
        %s303 = smul.u32 6, %s26
        %s304 = smul.u32 2, %s25
        %s305 = smul.u32 6, %s26
        %s306 = smul.u32 2, %s25
        %v308 = vld [vmem:[%s290] sm:$0xff]
        %v309 = vld [vmem:[%s290 + $0x8] sm:$0xff]
        %v310 = vld [vmem:[%s290 + $0x10] sm:$0xff]
        %v311 = vld [vmem:[%s290 + $0x18] sm:$0xff]
        %v312 = vld [vmem:[%s290 + $0x20] sm:$0xff]
        %v313 = vld [vmem:[%s290 + $0x28] sm:$0xff]
        %v314 = vld [vmem:[%s296] sm:$0xff]
        %v315 = vld [vmem:[%s296 + $0x8] sm:$0xff]
        %v316 = vld [vmem:[%s296 + $0x10] sm:$0xff]
        %v317 = vld [vmem:[%s296 + $0x18] sm:$0xff]
        %v318 = vld [vmem:[%s296 + $0x20] sm:$0xff]
        %v319 = vld [vmem:[%s296 + $0x28] sm:$0xff]
        %v320 = vld [vmem:[%s296 + $0x30] sm:$0xff]
        %v321 = vld [vmem:[%s296 + $0x38] sm:$0xff]
        %v322 = vld [vmem:[%s296 + $0x40] sm:$0xff]
        %v323 = vld [vmem:[%s296 + $0x48] sm:$0xff]
        %v324 = vld [vmem:[%s296 + $0x50] sm:$0xff]
        %v325 = vld [vmem:[%s296 + $0x58] sm:$0xff]
        %v326 = vld [vmem:[%s296 + $0x60] sm:$0xff]
        %v327 = vld [vmem:[%s296 + $0x68] sm:$0xff]
        %v328 = vld [vmem:[%s296 + $0x70] sm:$0xff]
        %v329 = vld [vmem:[%s296 + $0x78] sm:$0xff]
        %v330 = vld [vmem:[%s296 + $0x80] sm:$0xff]
        %v331 = vld [vmem:[%s296 + $0x88] sm:$0xff]
        %v332 = vld [vmem:[%s296 + $0x90] sm:$0xff]
        %v333 = vld [vmem:[%s296 + $0x98] sm:$0xff]
        %v334 = vld [vmem:[%s301] sm:$0x3]
        %v336 = vperm.slane %v334, 0
        %v337 = vperm.slane %v334, 1
        %v346 = vunpack.c.l.b16 %v308
        %v347 = vunpack.c.h.b16 %v308
        %v348 = vunpack.c.l.b16 %v309
        %v349 = vunpack.c.h.b16 %v309
        %v350 = vunpack.c.l.b16 %v310
        %v351 = vunpack.c.h.b16 %v310
        %v352 = vunpack.c.l.b16 %v311
        %v353 = vunpack.c.h.b16 %v311
        %v354 = vunpack.c.l.b16 %v312
        %v355 = vunpack.c.h.b16 %v312
        %v356 = vunpack.c.l.b16 %v313
        %v357 = vunpack.c.h.b16 %v313
        %v358 = vpack.c.b16 %v348, %v346
        %v359 = vpack.c.b16 %v349, %v347
        %v360 = vpack.c.b16 %v352, %v350
        %v361 = vpack.c.b16 %v353, %v351
        %v362 = vpack.c.b16 %v356, %v354
        %v363 = vpack.c.b16 %v357, %v355
        %v387 = vunpack.c.l.b16 %v314
        %v388 = vunpack.c.h.b16 %v314
        %v389 = vunpack.c.l.b16 %v315
        %v390 = vunpack.c.h.b16 %v315
        %v391 = vunpack.c.l.b16 %v316
        %v392 = vunpack.c.h.b16 %v316
        %v393 = vunpack.c.l.b16 %v317
        %v394 = vunpack.c.h.b16 %v317
        %v395 = vunpack.c.l.b16 %v318
        %v396 = vunpack.c.h.b16 %v318
        %v397 = vunpack.c.l.b16 %v319
        %v398 = vunpack.c.h.b16 %v319
        %v399 = vunpack.c.l.b16 %v320
        %v400 = vunpack.c.h.b16 %v320
        %v401 = vunpack.c.l.b16 %v321
        %v402 = vunpack.c.h.b16 %v321
        %v403 = vunpack.c.l.b16 %v322
        %v404 = vunpack.c.h.b16 %v322
        %v405 = vunpack.c.l.b16 %v323
        %v406 = vunpack.c.h.b16 %v323
        %v407 = vunpack.c.l.b16 %v324
        %v408 = vunpack.c.h.b16 %v324
        %v409 = vunpack.c.l.b16 %v325
        %v410 = vunpack.c.h.b16 %v325
        %v411 = vunpack.c.l.b16 %v326
        %v412 = vunpack.c.h.b16 %v326
        %v413 = vunpack.c.l.b16 %v327
        %v414 = vunpack.c.h.b16 %v327
        %v415 = vunpack.c.l.b16 %v328
        %v416 = vunpack.c.h.b16 %v328
        %v417 = vunpack.c.l.b16 %v329
        %v418 = vunpack.c.h.b16 %v329
        %v419 = vunpack.c.l.b16 %v330
        %v420 = vunpack.c.h.b16 %v330
        %v421 = vunpack.c.l.b16 %v331
        %v422 = vunpack.c.h.b16 %v331
        %v423 = vunpack.c.l.b16 %v332
        %v424 = vunpack.c.h.b16 %v332
        %v425 = vunpack.c.l.b16 %v333
        %v426 = vunpack.c.h.b16 %v333
        %v427 = vpack.c.b16 %v389, %v387
        %v428 = vpack.c.b16 %v390, %v388
        %v429 = vpack.c.b16 %v393, %v391
        %v430 = vpack.c.b16 %v394, %v392
        %v431 = vpack.c.b16 %v397, %v395
        %v432 = vpack.c.b16 %v398, %v396
        %v433 = vpack.c.b16 %v401, %v399
        %v434 = vpack.c.b16 %v402, %v400
        %v435 = vpack.c.b16 %v405, %v403
        %v436 = vpack.c.b16 %v406, %v404
        %v437 = vpack.c.b16 %v409, %v407
        %v438 = vpack.c.b16 %v410, %v408
        %v439 = vpack.c.b16 %v413, %v411
        %v440 = vpack.c.b16 %v414, %v412
        %v441 = vpack.c.b16 %v417, %v415
        %v442 = vpack.c.b16 %v418, %v416
        %v443 = vpack.c.b16 %v421, %v419
        %v444 = vpack.c.b16 %v422, %v420
        %v445 = vpack.c.b16 %v425, %v423
        %v446 = vpack.c.b16 %v426, %v424
        %vm467 = vcmask 261120
        %v469 = vsel %vm467, %v359, 0
        %v472 = vsel %vm467, %v361, 0
        %v475 = vsel %vm467, %v363, 0
        %477 = vmatpush.bf16.msra.mxu0 %v441
        %478 = vmatpush.bf16.msra.mxu0 %v439
        %479 = vmatpush.bf16.msra.mxu0 %v437
        %480 = vmatpush.bf16.msra.mxu0 %v435
        %481 = vmatpush.bf16.msra.mxu0 %v433
        %482 = vmatpush.bf16.msra.mxu0 %v431
        %483 = vmatpush.bf16.msra.mxu0 %v429
        %484 = vmatpush.bf16.msra.mxu0 %v427
        %485 = vmatmul.bf16.gmra.mxu0 %v358
        %v486 = vpop.f32.mrf.mxu0
        %v487 = vadd.f32 %v336, %v486
        %v488 = vpop.f32.mrf.mxu0
        %v489 = vadd.f32 %v336, %v488
        %490 = vmatmul.bf16.gmra.mxu0 %v360
        %v491 = vpop.f32.mrf.mxu0
        %v492 = vadd.f32 %v336, %v491
        %v493 = vpop.f32.mrf.mxu0
        %v494 = vadd.f32 %v336, %v493
        %495 = vmatmul.bf16.gmra.mxu0 %v362
        %v496 = vpop.f32.mrf.mxu0
        %v497 = vadd.f32 %v336, %v496
        %v498 = vpop.f32.mrf.mxu0
        %v499 = vadd.f32 %v336, %v498
        %500 = vdwg.mxu0
        %501 = vmatpush.bf16.msra.mxu0 0
        %502 = vmatpush.bf16.msra.mxu0 0
        %503 = vmatpush.bf16.msra.mxu0 0
        %504 = vmatpush.bf16.msra.mxu0 0
        %505 = vmatpush.bf16.msra.mxu0 0
        %506 = vmatpush.bf16.msra.mxu0 0
        %507 = vmatpush.bf16.msra.mxu0 %v445
        %508 = vmatpush.bf16.msra.mxu0 %v443
        %509 = vmatmul.bf16.gmra.mxu0 %v469
        %v510 = vpop.f32.mrf.mxu0
        %v511 = vadd.f32 %v487, %v510
        %v512 = vpop.f32.mrf.mxu0
        %v513 = vadd.f32 %v489, %v512
        %514 = vmatmul.bf16.gmra.mxu0 %v472
        %v515 = vpop.f32.mrf.mxu0
        %v516 = vadd.f32 %v492, %v515
        %v517 = vpop.f32.mrf.mxu0
        %v518 = vadd.f32 %v494, %v517
        %519 = vmatmul.bf16.gmra.mxu0 %v475
        %v520 = vpop.f32.mrf.mxu0
        %v521 = vadd.f32 %v497, %v520
        %v522 = vpop.f32.mrf.mxu0
        %v523 = vadd.f32 %v499, %v522
        %524 = vdwg.mxu0
        %525 = vmatpush.bf16.msra.mxu0 %v442
        %526 = vmatpush.bf16.msra.mxu0 %v440
        %527 = vmatpush.bf16.msra.mxu0 %v438
        %528 = vmatpush.bf16.msra.mxu0 %v436
        %529 = vmatpush.bf16.msra.mxu0 %v434
        %530 = vmatpush.bf16.msra.mxu0 %v432
        %531 = vmatpush.bf16.msra.mxu0 %v430
        %532 = vmatpush.bf16.msra.mxu0 %v428
        %533 = vmatmul.bf16.gmra.mxu0 %v358
        %v534 = vpop.f32.mrf.mxu0
        %v535 = vadd.f32 %v337, %v534
        %v536 = vpop.f32.mrf.mxu0
        %v537 = vadd.f32 %v337, %v536
        %538 = vmatmul.bf16.gmra.mxu0 %v360
        %v539 = vpop.f32.mrf.mxu0
        %v540 = vadd.f32 %v337, %v539
        %v541 = vpop.f32.mrf.mxu0
        %v542 = vadd.f32 %v337, %v541
        %543 = vmatmul.bf16.gmra.mxu0 %v362
        %v544 = vpop.f32.mrf.mxu0
        %v545 = vadd.f32 %v337, %v544
        %v546 = vpop.f32.mrf.mxu0
        %v547 = vadd.f32 %v337, %v546
        %548 = vdwg.mxu0
        %549 = vmatpush.bf16.msra.mxu0 0
        %550 = vmatpush.bf16.msra.mxu0 0
        %551 = vmatpush.bf16.msra.mxu0 0
        %552 = vmatpush.bf16.msra.mxu0 0
        %553 = vmatpush.bf16.msra.mxu0 0
        %554 = vmatpush.bf16.msra.mxu0 0
        %555 = vmatpush.bf16.msra.mxu0 %v446
        %556 = vmatpush.bf16.msra.mxu0 %v444
        %557 = vmatmul.bf16.gmra.mxu0 %v469
        %v558 = vpop.f32.mrf.mxu0
        %v559 = vadd.f32 %v535, %v558
        %v560 = vpop.f32.mrf.mxu0
        %v561 = vadd.f32 %v537, %v560
        %562 = vmatmul.bf16.gmra.mxu0 %v472
        %v563 = vpop.f32.mrf.mxu0
        %v564 = vadd.f32 %v540, %v563
        %v565 = vpop.f32.mrf.mxu0
        %v566 = vadd.f32 %v542, %v565
        %567 = vmatmul.bf16.gmra.mxu0 %v475
        %v568 = vpop.f32.mrf.mxu0
        %v569 = vadd.f32 %v545, %v568
        %v570 = vpop.f32.mrf.mxu0
        %v571 = vadd.f32 %v547, %v570
        %572 = vdwg.mxu0
        %v573 = vld [vmem:[%s244] sm:$0xff]
        %v574 = vld [vmem:[%s244 + $0x8] sm:$0xff]
        %v575 = vld [vmem:[%s244 + $0x10] sm:$0xff]
        %v576 = vld [vmem:[%s244 + $0x18] sm:$0xff]
        %v577 = vld [vmem:[%s244 + $0x20] sm:$0xff]
        %v578 = vld [vmem:[%s244 + $0x28] sm:$0xff]
        %v579 = vunpack.c.l.bf16 %v573
        %v580 = vunpack.c.h.bf16 %v573
        %v581 = vunpack.c.l.bf16 %v574
        %v582 = vunpack.c.h.bf16 %v574
        %v583 = vunpack.c.l.bf16 %v575
        %v584 = vunpack.c.h.bf16 %v575
        %v585 = vunpack.c.l.bf16 %v576
        %v586 = vunpack.c.h.bf16 %v576
        %v587 = vunpack.c.l.bf16 %v577
        %v588 = vunpack.c.h.bf16 %v577
        %v589 = vunpack.c.l.bf16 %v578
        %v590 = vunpack.c.h.bf16 %v578
        %v591 = vadd.f32 %v511, %v579
        %v592 = vadd.f32 %v559, %v580
        %v593 = vadd.f32 %v513, %v581
        %v594 = vadd.f32 %v561, %v582
        %v595 = vadd.f32 %v516, %v583
        %v596 = vadd.f32 %v564, %v584
        %v597 = vadd.f32 %v518, %v585
        %v598 = vadd.f32 %v566, %v586
        %v599 = vadd.f32 %v521, %v587
        %v600 = vadd.f32 %v569, %v588
        %v601 = vadd.f32 %v523, %v589
        %v602 = vadd.f32 %v571, %v590
        %v603 = vmax.f32 %v591, 0.0
        %v604 = vmax.f32 %v592, 0.0
        %v605 = vmax.f32 %v593, 0.0
        %v606 = vmax.f32 %v594, 0.0
        %v607 = vmax.f32 %v595, 0.0
        %v608 = vmax.f32 %v596, 0.0
        %v609 = vmax.f32 %v597, 0.0
        %v610 = vmax.f32 %v598, 0.0
        %v611 = vmax.f32 %v599, 0.0
        %v612 = vmax.f32 %v600, 0.0
        %v613 = vmax.f32 %v601, 0.0
        %v614 = vmax.f32 %v602, 0.0
        %v615 = vpack.c.bf16 %v604, %v603
        %v616 = vpack.c.bf16 %v606, %v605
        %v617 = vpack.c.bf16 %v608, %v607
        %v618 = vpack.c.bf16 %v610, %v609
        %v619 = vpack.c.bf16 %v612, %v611
        %v620 = vpack.c.bf16 %v614, %v613
        %621 = vst [vmem:[%s284] sm:$0xff] %v615
        %622 = vst [vmem:[%s284 + $0x8] sm:$0xff] %v616
        %623 = vst [vmem:[%s284 + $0x10] sm:$0xff] %v617
        %624 = vst [vmem:[%s284 + $0x18] sm:$0xff] %v618
        %625 = vst [vmem:[%s284 + $0x20] sm:$0xff] %v619
        %626 = vst [vmem:[%s284 + $0x28] sm:$0xff] %v620
        %s627 = sand.u32 %s149, 1
        %s628 = scalar_lea.sflag [#allocation4], %s627
        %s629 = sand.u32 %s149, 1
        %s630 = smul.addr %s629, 48
        %s631 = scalar_lea.vmem [#allocation5], %s630
        // Predicated region
        $region41: #{tpu_custom_call.1} parent=35 // pred_check
          %p632 = pneg %p159
        $region42: #{tpu_custom_call.1} parent=35 // pred_check_branch
          %634 = sbr.rel (%p632) target = $region44
        $region43: #{tpu_custom_call.1} parent=35 // pred_region
          %s635 = smul.u32 6, %s26
          %s636 = smul.u32 2, %s25
          %638 = vsyncadd %s628, 0
          %s639 = smul.addr %s635, 2
          %s640 = sadd.s32 %s636, %s639
          %s641 = smul.addr %s640, 4
          %s642 = scalar_lea.hbm %s4, %s641
          %s643 = sshll.u32 %s631, 4
          %s644 = int_to_ptr.vmem [resolvable:$true] %s643
          %s645 = sshll.u32 %s642, 4
          %s646 = int_to_ptr.hbm [resolvable:$true] %s645
          %651 = dma.vmem_to_hbm [thread:$0]  %s644, 768, %s646, %s628, 128, 128, 8
        $region44: #{tpu_custom_call.1} parent=35 // pred_fallthru
          _
      $region36: #{tpu_custom_call.1} parent=5 // pred_fallthru
        _
      %p652 = scmp.le.s32.totalorder 2, %s16
      // Predicated region
      $region45: #{tpu_custom_call.1} parent=5 // pred_check
        %p653 = pneg %p652
      $region46: #{tpu_custom_call.1} parent=5 // pred_check_branch
        %655 = sbr.rel (%p653) target = $region48
      $region47: #{tpu_custom_call.1} parent=5 // pred_region
        %s656 = ssub.s32 %s16, 2
        // Predicated region
        $region49: #{tpu_custom_call.1} parent=47 // pred_check
          %p657 = pneg %p165
        $region50: #{tpu_custom_call.1} parent=47 // pred_check_branch
          %659 = sbr.rel (%p657) target = $region52
        $region51: #{tpu_custom_call.1} parent=47 // pred_region
          %s660 = sand.u32 %s150, 1
          %s661 = scalar_lea.sflag [#allocation4], %s660
          %s662 = sand.u32 %s150, 1
          %s663 = smul.addr %s662, 48
          %s664 = scalar_lea.vmem [#allocation5], %s663
          %666 = dma.done %s661, 768
        $region52: #{tpu_custom_call.1} parent=47 // pred_fallthru
          _
      $region48: #{tpu_custom_call.1} parent=5 // pred_fallthru
        _
    $region6: #{tpu_custom_call.1} parent=1 // loop_footer
      %s20 = sadd.s32 1, %s16
    $region7: #{tpu_custom_call.1} parent=1 // loop_footer_branch
      %15 = sbr.rel target = $region3
    $region8: #{tpu_custom_call.1} parent=1 // loop_exit
      _
    %667 = vsyncpa [#allocation3], 1
    %s668 = scalar_lea.sflag [#allocation3], 1
    %669 = vsyncpa %s668, 1
    %670 = vsyncpa [#allocation4], 1
    %s671 = scalar_lea.sflag [#allocation4], 1
    %672 = vsyncpa %s671, 1

</llo_original>
